<compile_context>
chip_gen: v7x
topology: tpu7x:2x2x1
jax: 0.10.0
libtpu: 0.0.40
codegen_flags: <defaults>
</compile_context>

<pallas_src>
import math

import jax
import jax.numpy as jnp
from jax import lax
from jax.experimental import pallas as pl
from jax.experimental.pallas import tpu as pltpu

_LANE = 128
_SUB = 8


def _round_up(x: int, m: int) -> int:
    return ((x + m - 1) // m) * m


def _cdiv(a: int, b: int) -> int:
    return -(-a // b)


def _make_kernel(*, ts, n_s, s_rem, f_in, h_p, use_mxu_up):
    """Build the kernel with all static tiling parameters baked in."""

    def kernel(x_ref, up_ref, c_ref, d_ref, out_ref, xs_acc):
        s = pl.program_id(1)

        @pl.when(s == 0)
        def _init():
            xs_acc[...] = jnp.zeros_like(xs_acc)

        def accumulate(xb):
            # einsum 'bsi,ik->bk' == (sum over s) then contract over i; the per-step
            # sublane sum hides under the next block's DMA.
            xs_acc[...] += jnp.sum(xb.astype(jnp.float32), axis=1)

        if s_rem == ts:
            accumulate(x_ref[...])
        else:
            # Ragged final S block: rows >= s_rem come from past the array edge
            # (unspecified data) and must be masked out of the running sum.
            @pl.when(s < n_s - 1)
            def _full():
                accumulate(x_ref[...])

            @pl.when(s == n_s - 1)
            def _ragged():
                row = lax.broadcasted_iota(jnp.int32, (ts, f_in), 0)
                accumulate(jnp.where((row < s_rem)[None, :, :], x_ref[...], 0.0))

        @pl.when(s == n_s - 1)
        def _epilogue():
            xs = xs_acc[...]                                    # [TB, F_in]
            if use_mxu_up:
                u = jnp.dot(xs, up_ref[...],
                            preferred_element_type=jnp.float32)  # [TB, 2*H_p]
            else:
                # Tiny F_in: unrolled VPU FMA (once per batch tile) instead of an
                # MXU matmul with a tiny contracting dimension.
                up = up_ref[...]                                 # [F_in, 2*H_p]
                u = jnp.zeros((xs.shape[0], 2 * h_p), jnp.float32)
                for i in range(f_in):
                    u = u + xs[:, i:i + 1] * up[i:i + 1, :]
            u_r = u[:, :h_p]
            u_i = u[:, h_p:]

            # mat_exp ** u = exp(u * Log(mat_exp));  c = [log|z| ; arg z].
            # Padded lanes of c are 0 => e_r = 1, e_i = 0 there; the matching rows
            # of d are zero-padded so the padding contributes nothing to the output.
            c_r = c_ref[0:1, :]
            c_i = c_ref[1:2, :]
            w_r = u_r * c_r - u_i * c_i
            w_i = u_r * c_i + u_i * c_r
            mag = jnp.exp(w_r)
            e_r = mag * jnp.cos(w_i)
            e_i = mag * jnp.sin(w_i)

            # [out_r | out_i] = e_r @ [dn_r|dn_i] + e_i @ [-dn_i|dn_r]   (no concat)
            out_ref[...] = (
                jnp.dot(e_r, d_ref[0], preferred_element_type=jnp.float32)
                + jnp.dot(e_i, d_ref[1], preferred_element_type=jnp.float32))

    return kernel


def exponential_warper_1d(x, mat_up, mat_down, mat_exp, *, tb=None, ts=None,
                          stream_dtype=None):
    """Forward pass of ExponentialWarper1D.

    x: [B, ..., F_in], real float or complex; parameters complex64.
    Returns complex64 [B, F_out].  All middle dims of x are flattened
    (matches einsum 'b...i,ik->bk').
    """
    x = jnp.asarray(x)
    B = int(x.shape[0])
    F_in = int(x.shape[-1])
    H = int(mat_up.shape[1])
    F_out = int(mat_down.shape[1])

    up_r = jnp.real(mat_up).astype(jnp.float32)
    up_i = jnp.imag(mat_up).astype(jnp.float32)

    if jnp.issubdtype(x.dtype, jnp.complexfloating):
        # De-interleave complex x into a real stream [r0, i0, r1, i1, ...] and
        # interleave mat_up rows to match: the same real kernel then implements the
        # complex-input path of the module.
        xc = x.reshape(B, -1, F_in)
        x3 = jnp.stack([jnp.real(xc), jnp.imag(xc)], axis=-1)
        x3 = x3.reshape(B, -1, 2 * F_in).astype(jnp.float32)
        F_eff = 2 * F_in
        up_top = jnp.stack([up_r, -up_i], axis=1).reshape(F_eff, H)  # -> u_r
        up_bot = jnp.stack([up_i, up_r], axis=1).reshape(F_eff, H)   # -> u_i
    else:
        x3 = x.reshape(B, -1, F_in).astype(jnp.float32)
        F_eff = F_in
        up_top = up_r
        up_bot = up_i
    if stream_dtype is not None:
        # Optional reduced-precision streaming of x (e.g. bf16) to halve HBM bytes;
        # accumulation stays float32 in-kernel.
        x3 = x3.astype(stream_dtype)
    S = int(x3.shape[1])
    itemsize = jnp.dtype(x3.dtype).itemsize

    H_p = _round_up(H, _LANE)
    F_out_p = _round_up(F_out, _LANE)
    F_lane = _round_up(F_eff, _LANE)   # VMEM lane footprint of one x-block row

    # ---- batch tiling: >= 2 tiles when B >= 16 so the "parallel" axis can split
    # across v7x's two TensorCores; single full-extent tile for small B.
    if tb is None:
        TB = B if B < 16 else min(512, _round_up(_cdiv(B, 2), _SUB))
    else:
        TB = max(1, min(int(tb), B))
    if TB < B and TB % _SUB:
        TB = _round_up(TB, _SUB)
    if TB >= B:
        TB = B
    n_b = _cdiv(B, TB)
    B_out = n_b * TB

    # ---- VMEM accounting (constant weight blocks / out are double-buffered by the
    # default pipeliner; accounted for here so the x tile + vmem limit stay safe on
    # every generation including v7x's 64 MiB).
    fixed_vmem = 4 * (2 * _round_up(F_eff, _SUB) * 2 * H_p        # up_cat
                      + 2 * _SUB * H_p                            # c
                      + 2 * 2 * H_p * 2 * F_out_p                 # d
                      + 2 * _round_up(TB, _SUB) * 2 * F_out_p     # out block
                      + _round_up(TB, _SUB) * F_lane)             # xs_acc scratch

    # ---- S tiling: biggest x block that keeps total VMEM around ~32 MiB.
    if ts is None:
        budget = 32 * 1024 * 1024
        per_buf = min(max(budget - fixed_vmem, 4 * 1024 * 1024) // 2,
                      12 * 1024 * 1024)
        ts = max(_SUB, per_buf // (TB * F_lane * itemsize) // _SUB * _SUB)
    TS = int(ts)
    if TS >= S:
        TS = S
    else:
        TS = _round_up(max(TS, _SUB), _SUB)
        if TS >= S:
            TS = S
    n_s = _cdiv(S, TS)
    s_rem = S - (n_s - 1) * TS

    x_vmem = 2 * TB * _round_up(TS, _SUB) * F_lane * itemsize
    vmem_limit = int(max(fixed_vmem + x_vmem + (2 << 20), 20 << 20))

    # ---- parameter transforms (pure glue, once per call, tiny vs streaming x) ----
    up_cat = jnp.zeros((F_eff, 2 * H_p), jnp.float32)
    up_cat = up_cat.at[:, :H].set(up_top).at[:, H_p:H_p + H].set(up_bot)

    # Log(mat_exp), principal branch. Padded lanes stay 0 (behave like mat_exp == 1).
    # TODO(synk): mat_exp entries exactly equal to 0 produce -inf here (torch's 0**u
    # edge case is not reproduced); the module's init keeps entries near 1.
    ex_r = jnp.real(mat_exp).astype(jnp.float32)
    ex_i = jnp.imag(mat_exp).astype(jnp.float32)
    c = jnp.zeros((2, H_p), jnp.float32)
    c = c.at[0, :H].set(jnp.log(jnp.hypot(ex_r, ex_i)))
    c = c.at[1, :H].set(jnp.arctan2(ex_i, ex_r))

    dn_r = jnp.real(mat_down).astype(jnp.float32)
    dn_i = jnp.imag(mat_down).astype(jnp.float32)
    # d[0] = [dn_r | dn_i], d[1] = [-dn_i | dn_r]; rows H..H_p stay zero because they
    # multiply the e_r == 1 / e_i == 0 padded lanes.
    d = jnp.zeros((2, H_p, 2 * F_out_p), jnp.float32)
    d = d.at[0, :H, :F_out].set(dn_r).at[0, :H, F_out_p:F_out_p + F_out].set(dn_i)
    d = d.at[1, :H, :F_out].set(-dn_i).at[1, :H, F_out_p:F_out_p + F_out].set(dn_r)

    kernel = _make_kernel(ts=TS, n_s=n_s, s_rem=s_rem, f_in=F_eff, h_p=H_p,
                          use_mxu_up=F_eff > 32)

    cost = pl.CostEstimate(
        flops=(2 * B_out * F_eff * 2 * H_p                 # up projection
               + 2 * 2 * B_out * H_p * 2 * F_out_p),       # two down matmuls
        transcendentals=3 * B_out * H_p,                   # exp, cos, sin
        bytes_accessed=(x3.size * itemsize
                        + (up_cat.size + c.size + d.size + B_out * 2 * F_out_p) * 4),
    )

    out = pl.pallas_call(
        kernel,
        out_shape=jax.ShapeDtypeStruct((B_out, 2 * F_out_p), jnp.float32),
        grid_spec=pltpu.PrefetchScalarGridSpec(
            num_scalar_prefetch=0,
            grid=(n_b, n_s),
            in_specs=[
                # x streamed UNPADDED: full-extent last dim -> no HBM byte inflation.
                pl.BlockSpec((TB, TS, F_eff), lambda b, s: (b, s, 0)),
                # Parameters: constant block index -> stay VMEM-resident (no re-DMA).
                pl.BlockSpec((F_eff, 2 * H_p), lambda b, s: (0, 0)),
                pl.BlockSpec((2, H_p), lambda b, s: (0, 0)),
                pl.BlockSpec((2, H_p, 2 * F_out_p), lambda b, s: (0, 0, 0)),
            ],
            # One lane-dense output block per batch tile, constant across s.
            out_specs=pl.BlockSpec((TB, 2 * F_out_p), lambda b, s: (b, 0)),
            scratch_shapes=[pltpu.VMEM((TB, F_eff), jnp.float32)],
        ),
        compiler_params=pltpu.CompilerParams(
            dimension_semantics=("parallel", "arbitrary"),
            vmem_limit_bytes=vmem_limit),
        cost_estimate=cost,
    )(x3, up_cat, c, d)

    out_r = out[:B, :F_out]
    out_i = out[:B, F_out_p:F_out_p + F_out]
    return lax.complex(out_r, out_i)


def _init_params(key, features_in, features_hidden=None, features_out=None):
    """Deterministic re-implementation of the PyTorch __init__ distributions."""
    features_hidden = features_hidden if features_hidden is not None else features_in * 2
    features_out = features_out if features_out is not None else features_in
    k1, k2, k3, k4, k5, k6 = jax.random.split(key, 6)

    a_up = math.sqrt(math.pi / features_in)
    up_r = jax.random.uniform(k1, (features_in, features_hidden),
                              minval=-a_up, maxval=a_up, dtype=jnp.float32)
    up_i = jax.random.normal(k2, (features_in, features_hidden), dtype=jnp.float32) \
        * (1.0 / (features_in * features_hidden))
    mat_up = up_r + 1j * up_i

    a_dn = math.sqrt(math.pi / features_hidden)
    dn_r = jax.random.uniform(k3, (features_hidden, features_out),
                              minval=-a_dn, maxval=a_dn, dtype=jnp.float32)
    dn_i = jax.random.normal(k4, (features_hidden, features_out), dtype=jnp.float32) \
        * (1.0 / (features_hidden * features_out))
    mat_down = dn_r + 1j * dn_i

    a_ex = math.sqrt(math.pi / features_hidden)
    ex_r = jax.random.uniform(k5, (features_hidden,),
                              minval=1.0 - a_ex, maxval=1.0 + a_ex, dtype=jnp.float32)
    ex_i = jax.random.normal(k6, (features_hidden,), dtype=jnp.float32) \
        * (1.0 / features_hidden)
    mat_exp = ex_r + 1j * ex_i

    return (mat_up.astype(jnp.complex64), mat_down.astype(jnp.complex64),
            mat_exp.astype(jnp.complex64))


def _reference(x, mat_up, mat_down, mat_exp):
    """Plain-JAX complex reference mirroring the PyTorch forward."""
    xc = x.reshape(x.shape[0], -1, x.shape[-1]).astype(jnp.complex64)
    u = jnp.einsum('bsi,ik->bk', xc, mat_up)
    e = mat_exp[None, :] ** u
    return jnp.einsum('bi,ik->bk', e, mat_down)


if __name__ == "__main__":
    key = jax.random.PRNGKey(0)

    # --- 1. small config (module defaults: hidden = 2*F_in, out = F_in) ---
    B, S, F_IN = 2, 8, 4
    kx, kp, key = jax.random.split(key, 3)
    x = jax.random.normal(kx, (B, S, F_IN), dtype=jnp.float32)
    mat_up, mat_down, mat_exp = _init_params(kp, F_IN)
    out = jax.block_until_ready(exponential_warper_1d(x, mat_up, mat_down, mat_exp))
    ref = _reference(x, mat_up, mat_down, mat_exp)
    assert out.shape == ref.shape and out.dtype == jnp.complex64
    assert jnp.allclose(out, ref, rtol=1e-4, atol=1e-4)

    # --- 2. larger config: auto TB -> 2 batch tiles (ragged), ragged S tiling ---
    B2, S2, F_IN2, F_HID2, F_OUT2 = 24, 64, 16, 48, 20
    kx2, kp2 = jax.random.split(key)
    x2 = jax.random.normal(kx2, (B2, S2, F_IN2), dtype=jnp.float32)
    mu2, md2, me2 = _init_params(kp2, F_IN2, F_HID2, F_OUT2)
    out2 = jax.block_until_ready(exponential_warper_1d(x2, mu2, md2, me2, ts=24))
    ref2 = _reference(x2, mu2, md2, me2)
    assert out2.shape == ref2.shape and out2.dtype == jnp.complex64
    assert jnp.allclose(out2, ref2, rtol=2e-3, atol=2e-3)

    # --- 3. complex-valued input, odd sizes, ragged final S block ---
    B3, S3, F_IN3, F_HID3, F_OUT3 = 5, 13, 5, 7, 3
    kxa, kxb, kp3 = jax.random.split(jax.random.PRNGKey(1), 3)
    xc3 = (0.5 * jax.random.normal(kxa, (B3, S3, F_IN3), dtype=jnp.float32)
           + 0.5j * jax.random.normal(kxb, (B3, S3, F_IN3), dtype=jnp.float32)
           ).astype(jnp.complex64)
    mu3, md3, me3 = _init_params(kp3, F_IN3, F_HID3, F_OUT3)
    out3 = jax.block_until_ready(exponential_warper_1d(xc3, mu3, md3, me3, ts=8))
    ref3 = _reference(xc3, mu3, md3, me3)
    assert out3.shape == ref3.shape and out3.dtype == jnp.complex64
    assert jnp.allclose(out3, ref3, rtol=2e-3, atol=2e-3)

    print("KERNEL_OK")
</pallas_src>

<mosaic_0001>
module attributes {stable_mosaic.version = 11 : i64} {
  func.func @kernel(%arg0: i32, %arg1: i32, %arg2: memref<2x8x4xf32, #tpu.memory_space<vmem>>, %arg3: memref<4x256xf32, #tpu.memory_space<vmem>>, %arg4: memref<2x128xf32, #tpu.memory_space<vmem>>, %arg5: memref<2x128x256xf32, #tpu.memory_space<vmem>>, %arg6: memref<2x256xf32, #tpu.memory_space<vmem>>, %arg7: memref<2x4xf32, #tpu.memory_space<vmem>>) attributes {dimension_semantics = [#tpu.dimension_semantics<parallel>, #tpu.dimension_semantics<arbitrary>], iteration_bounds = array<i64: 1, 1>, scalar_prefetch = 0 : i64, scratch_operands = 1 : i64, tpu.core_type = #tpu.core_type<tc>, window_params = [{transform_indices = @transform_0, window_bounds = array<i64: 2, 8, 4>}, {pipeline_mode = #tpu.pipeline_mode<synchronous>, transform_indices = @transform_1, window_bounds = array<i64: 4, 256>}, {pipeline_mode = #tpu.pipeline_mode<synchronous>, transform_indices = @transform_2, window_bounds = array<i64: 2, 128>}, {pipeline_mode = #tpu.pipeline_mode<synchronous>, transform_indices = @transform_3, window_bounds = array<i64: 2, 128, 256>}, {transform_indices = @transform_4, window_bounds = array<i64: 2, 256>}]} {
    %c0_i32 = arith.constant 0 : i32
    %0 = arith.cmpi eq, %arg1, %c0_i32 : i32
    %1 = arith.extui %0 : i1 to i32
    %c0_i32_0 = arith.constant 0 : i32
    %2 = arith.cmpi ne, %1, %c0_i32_0 : i32
    scf.if %2 {
      %cst_9 = arith.constant 0.000000e+00 : f32
      %11 = vector.broadcast %cst_9 : f32 to vector<2x4xf32>
      %c0_10 = arith.constant 0 : index
      %c0_11 = arith.constant 0 : index
      %12 = vector.load %arg7[%c0_10, %c0_11] : memref<2x4xf32, #tpu.memory_space<vmem>>, vector<2x4xf32>
      tpu.vector_store %arg7[%c0_10, %c0_11], %11 {strides = array<i32>} : memref<2x4xf32, #tpu.memory_space<vmem>>, vector<2x4xf32>,
    } else {
    }
    %c0 = arith.constant 0 : index
    %c0_1 = arith.constant 0 : index
    %c0_2 = arith.constant 0 : index
    %3 = vector.load %arg2[%c0, %c0_1, %c0_2] : memref<2x8x4xf32, #tpu.memory_space<vmem>>, vector<2x8x4xf32>
    %c0_3 = arith.constant 0 : index
    %c0_4 = arith.constant 0 : index
    %4 = vector.load %arg7[%c0_3, %c0_4] : memref<2x4xf32, #tpu.memory_space<vmem>>, vector<2x4xf32>
    %cst = arith.constant dense<0.000000e+00> : vector<2x4xf32>
    %5 = vector.multi_reduction <add>, %3, %cst [1] : vector<2x8x4xf32> to vector<2x4xf32>
    %6 = arith.addf %4, %5 : vector<2x4xf32>
    %c0_5 = arith.constant 0 : index
    %c0_6 = arith.constant 0 : index
    %7 = vector.load %arg7[%c0_5, %c0_6] : memref<2x4xf32, #tpu.memory_space<vmem>>, vector<2x4xf32>
    tpu.vector_store %arg7[%c0_5, %c0_6], %6 {strides = array<i32>} : memref<2x4xf32, #tpu.memory_space<vmem>>, vector<2x4xf32>,
    %c0_i32_7 = arith.constant 0 : i32
    %8 = arith.cmpi eq, %arg1, %c0_i32_7 : i32
    %9 = arith.extui %8 : i1 to i32
    %c0_i32_8 = arith.constant 0 : i32
    %10 = arith.cmpi ne, %9, %c0_i32_8 : i32
    scf.if %10 {
      %c0_9 = arith.constant 0 : index
      %c0_10 = arith.constant 0 : index
      %11 = vector.load %arg7[%c0_9, %c0_10] : memref<2x4xf32, #tpu.memory_space<vmem>>, vector<2x4xf32>
      %c0_11 = arith.constant 0 : index
      %c0_12 = arith.constant 0 : index
      %12 = vector.load %arg3[%c0_11, %c0_12] : memref<4x256xf32, #tpu.memory_space<vmem>>, vector<4x256xf32>
      %cst_13 = arith.constant 0.000000e+00 : f32
      %13 = vector.broadcast %cst_13 : f32 to vector<2x256xf32>
      %14 = vector.extract_strided_slice %11 {offsets = [0, 0], sizes = [2, 1], strides = [1, 1]} : vector<2x4xf32> to vector<2x1xf32>
      %15 = vector.extract_strided_slice %12 {offsets = [0, 0], sizes = [1, 256], strides = [1, 1]} : vector<4x256xf32> to vector<1x256xf32>
      %16 = vector.broadcast %14 : vector<2x1xf32> to vector<2x256xf32>
      %17 = vector.broadcast %15 : vector<1x256xf32> to vector<2x256xf32>
      %18 = arith.mulf %16, %17 : vector<2x256xf32>
      %19 = arith.addf %13, %18 : vector<2x256xf32>
      %20 = vector.extract_strided_slice %11 {offsets = [0, 1], sizes = [2, 1], strides = [1, 1]} : vector<2x4xf32> to vector<2x1xf32>
      %21 = vector.extract_strided_slice %12 {offsets = [1, 0], sizes = [1, 256], strides = [1, 1]} : vector<4x256xf32> to vector<1x256xf32>
      %22 = vector.broadcast %20 : vector<2x1xf32> to vector<2x256xf32>
      %23 = vector.broadcast %21 : vector<1x256xf32> to vector<2x256xf32>
      %24 = arith.mulf %22, %23 : vector<2x256xf32>
      %25 = arith.addf %19, %24 : vector<2x256xf32>
      %26 = vector.extract_strided_slice %11 {offsets = [0, 2], sizes = [2, 1], strides = [1, 1]} : vector<2x4xf32> to vector<2x1xf32>
      %27 = vector.extract_strided_slice %12 {offsets = [2, 0], sizes = [1, 256], strides = [1, 1]} : vector<4x256xf32> to vector<1x256xf32>
      %28 = vector.broadcast %26 : vector<2x1xf32> to vector<2x256xf32>
      %29 = vector.broadcast %27 : vector<1x256xf32> to vector<2x256xf32>
      %30 = arith.mulf %28, %29 : vector<2x256xf32>
      %31 = arith.addf %25, %30 : vector<2x256xf32>
      %32 = vector.extract_strided_slice %11 {offsets = [0, 3], sizes = [2, 1], strides = [1, 1]} : vector<2x4xf32> to vector<2x1xf32>
      %33 = vector.extract_strided_slice %12 {offsets = [3, 0], sizes = [1, 256], strides = [1, 1]} : vector<4x256xf32> to vector<1x256xf32>
      %34 = vector.broadcast %32 : vector<2x1xf32> to vector<2x256xf32>
      %35 = vector.broadcast %33 : vector<1x256xf32> to vector<2x256xf32>
      %36 = arith.mulf %34, %35 : vector<2x256xf32>
      %37 = arith.addf %31, %36 : vector<2x256xf32>
      %38 = vector.extract_strided_slice %37 {offsets = [0, 0], sizes = [2, 128], strides = [1, 1]} : vector<2x256xf32> to vector<2x128xf32>
      %39 = vector.extract_strided_slice %37 {offsets = [0, 128], sizes = [2, 128], strides = [1, 1]} : vector<2x256xf32> to vector<2x128xf32>
      %c0_14 = arith.constant 0 : index
      %c0_15 = arith.constant 0 : index
      %40 = vector.load %arg4[%c0_14, %c0_15] : memref<2x128xf32, #tpu.memory_space<vmem>>, vector<1x128xf32>
      %c1 = arith.constant 1 : index
      %c0_16 = arith.constant 0 : index
      %41 = vector.load %arg4[%c1, %c0_16] : memref<2x128xf32, #tpu.memory_space<vmem>>, vector<1x128xf32>
      %42 = vector.broadcast %40 : vector<1x128xf32> to vector<2x128xf32>
      %43 = arith.mulf %38, %42 : vector<2x128xf32>
      %44 = vector.broadcast %41 : vector<1x128xf32> to vector<2x128xf32>
      %45 = arith.mulf %39, %44 : vector<2x128xf32>
      %46 = arith.subf %43, %45 : vector<2x128xf32>
      %47 = vector.broadcast %41 : vector<1x128xf32> to vector<2x128xf32>
      %48 = arith.mulf %38, %47 : vector<2x128xf32>
      %49 = vector.broadcast %40 : vector<1x128xf32> to vector<2x128xf32>
      %50 = arith.mulf %39, %49 : vector<2x128xf32>
      %51 = arith.addf %48, %50 : vector<2x128xf32>
      %52 = math.exp %46 : vector<2x128xf32>
      %53 = math.cos %51 : vector<2x128xf32>
      %54 = arith.mulf %52, %53 : vector<2x128xf32>
      %55 = math.sin %51 : vector<2x128xf32>
      %56 = arith.mulf %52, %55 : vector<2x128xf32>
      %c0_17 = arith.constant 0 : index
      %c0_18 = arith.constant 0 : index
      %c0_19 = arith.constant 0 : index
      %57 = vector.load %arg5[%c0_17, %c0_18, %c0_19] : memref<2x128x256xf32, #tpu.memory_space<vmem>>, vector<1x128x256xf32>
      %58 = vector.shape_cast %57 : vector<1x128x256xf32> to vector<128x256xf32>
      %cst_20 = arith.constant dense<0.000000e+00> : vector<2x256xf32>
      %59 = tpu.matmul %54, %58, %cst_20 {dimension_numbers = #tpu.dot_dimension_numbers<[1], [0], [0], [1], [0, 0, 1, 1], [], []>} : vector<2x128xf32>, vector<128x256xf32>, vector<2x256xf32> -> vector<2x256xf32>
      %c1_21 = arith.constant 1 : index
      %c0_22 = arith.constant 0 : index
      %c0_23 = arith.constant 0 : index
      %60 = vector.load %arg5[%c1_21, %c0_22, %c0_23] : memref<2x128x256xf32, #tpu.memory_space<vmem>>, vector<1x128x256xf32>
      %61 = vector.shape_cast %60 : vector<1x128x256xf32> to vector<128x256xf32>
      %cst_24 = arith.constant dense<0.000000e+00> : vector<2x256xf32>
      %62 = tpu.matmul %56, %61, %cst_24 {dimension_numbers = #tpu.dot_dimension_numbers<[1], [0], [0], [1], [0, 0, 1, 1], [], []>} : vector<2x128xf32>, vector<128x256xf32>, vector<2x256xf32> -> vector<2x256xf32>
      %63 = arith.addf %59, %62 : vector<2x256xf32>
      %c0_25 = arith.constant 0 : index
      %c0_26 = arith.constant 0 : index
      %64 = vector.load %arg6[%c0_25, %c0_26] : memref<2x256xf32, #tpu.memory_space<vmem>>, vector<2x256xf32>
      tpu.vector_store %arg6[%c0_25, %c0_26], %63 {strides = array<i32>} : memref<2x256xf32, #tpu.memory_space<vmem>>, vector<2x256xf32>,
    } else {
    }
    return
  }
  func.func @transform_0(%arg0: i32, %arg1: i32) -> (i32, i32, i32) {
    %c0_i32 = arith.constant 0 : i32
    %c0_i32_0 = arith.constant 0 : i32
    return %arg0, %arg1, %c0_i32 : i32, i32, i32
  }
  func.func @transform_1(%arg0: i32, %arg1: i32) -> (i32, i32) {
    %c0_i32 = arith.constant 0 : i32
    %c0_i32_0 = arith.constant 0 : i32
    %c0_i32_1 = arith.constant 0 : i32
    return %c0_i32, %c0_i32_0 : i32, i32
  }
  func.func @transform_2(%arg0: i32, %arg1: i32) -> (i32, i32) {
    %c0_i32 = arith.constant 0 : i32
    %c0_i32_0 = arith.constant 0 : i32
    %c0_i32_1 = arith.constant 0 : i32
    return %c0_i32, %c0_i32_0 : i32, i32
  }
  func.func @transform_3(%arg0: i32, %arg1: i32) -> (i32, i32, i32) {
    %c0_i32 = arith.constant 0 : i32
    %c0_i32_0 = arith.constant 0 : i32
    %c0_i32_1 = arith.constant 0 : i32
    %c0_i32_2 = arith.constant 0 : i32
    return %c0_i32, %c0_i32_0, %c0_i32_1 : i32, i32, i32
  }
  func.func @transform_4(%arg0: i32, %arg1: i32) -> (i32, i32) {
    %c0_i32 = arith.constant 0 : i32
    %c0_i32_0 = arith.constant 0 : i32
    return %arg0, %c0_i32 : i32, i32
  }
}

</mosaic_0001>

<llo_original>
// kernel: tpu_custom_call.1
$region0: #{tpu_custom_call.1}
  #allocation0 [shape = 'u32[]', space=smem, size = 0x4, offset = 0x4, fixed_abs, tag = 'smem constant byte address 0x4 - core index']
  #allocation1 [shape = 'u32[144,128]{1,0:T(1,128)}', space=vmem, size = 0x12000, scoped, tag = 'internal scratch']
  #allocation2 [shape = 'f32[2,4]{1,0:T(2,128)}', space=vmem, size = 0x400, scoped, tag = 'scratch operand']
  %s0 = inlined_call_operand.vmem [shape: f32[2,8,4], index: 0, kind: input, shape index: {}]
  %s1 = inlined_call_operand.vmem [shape: f32[4,256], index: 1, kind: input, shape index: {}]
  %s2 = inlined_call_operand.vmem [shape: f32[2,128], index: 2, kind: input, shape index: {}]
  %s3 = inlined_call_operand.hbm [shape: f32[2,128,256], index: 3, kind: input, shape index: {}]
  %s4 = inlined_call_operand.hbm [shape: f32[2,256], index: 4, kind: output, shape index: {}]
  %s5 = sld [smem:[#allocation0]]
  $region38: #{tpu_custom_call.1} parent=0
    _
  %s7 = ssub.s32 1, %s5
  %s8 = scalar_select 0, %s7, %s5
  $region1: #{tpu_custom_call.1} parent=0
    #allocation3 [shape = 'u8[262144]{0}', space=vmem, size = 0x40000, scoped, tag = 'input window, operand 3, single buffered']
    #allocation4 [shape = 's32[1]{0}', space=sflag, size = 0x4, scoped, tag = 'scoped memory for tpu_custom_call.1']
    #allocation5 [shape = 's32[1]{0}', space=sflag, size = 0x4, scoped, tag = 'scoped memory for tpu_custom_call.1']
    #allocation6 [shape = 'u8[2048]{0}', space=vmem, size = 0x800, scoped, tag = 'output window, operand 0, single buffered']
    %9 = vsyncpa [#allocation4], 0
    %10 = vsyncpa [#allocation5], 0
    // Predicated region
    $region2: #{tpu_custom_call.1} parent=1 // pred_check
      _
    $region3: #{tpu_custom_call.1} parent=1 // pred_check_branch
      %12 = sbr.rel (0) target = $region5
    $region4: #{tpu_custom_call.1} parent=1 // pred_region
      _
    $region5: #{tpu_custom_call.1} parent=1 // pred_fallthru
      _
    // Predicated region
    $region6: #{tpu_custom_call.1} parent=1 // pred_check
      _
    $region7: #{tpu_custom_call.1} parent=1 // pred_check_branch
      %14 = sbr.rel (0) target = $region9
    $region8: #{tpu_custom_call.1} parent=1 // pred_region
      _
    $region9: #{tpu_custom_call.1} parent=1 // pred_fallthru
      _
    // Predicated region
    $region10: #{tpu_custom_call.1} parent=1 // pred_check
      _
    $region11: #{tpu_custom_call.1} parent=1 // pred_check_branch
      %16 = sbr.rel (0) target = $region13
    $region12: #{tpu_custom_call.1} parent=1 // pred_region
      _
    $region13: #{tpu_custom_call.1} parent=1 // pred_fallthru
      _
    // Predicated region
    $region14: #{tpu_custom_call.1} parent=1 // pred_check
      _
    $region15: #{tpu_custom_call.1} parent=1 // pred_check_branch
      %18 = sbr.rel (0) target = $region17
    $region16: #{tpu_custom_call.1} parent=1 // pred_region
      %s20 = ssub.s32 8192, 8192
      %21 = vsyncadd [#allocation4], %s20
      %s22 = sshll.u32 [#allocation3], 4
      %s23 = int_to_ptr.vmem [resolvable:$true] %s22
      %28 = dma.hbm_to_vmem [thread:$0]  %s3, 8192, %s23, [#allocation4], 256, 256, 16
    $region17: #{tpu_custom_call.1} parent=1 // pred_fallthru
      _
    // Predicated region
    $region18: #{tpu_custom_call.1} parent=1 // pred_check
      _
    $region19: #{tpu_custom_call.1} parent=1 // pred_check_branch
      %30 = sbr.rel (0) target = $region21
    $region20: #{tpu_custom_call.1} parent=1 // pred_region
      %31 = dma.done [#allocation4], 8192
    $region21: #{tpu_custom_call.1} parent=1 // pred_fallthru
      _
    %p32 = scmp.eq.s32.totalorder 0, 0
    // Predicated region
    $region22: #{tpu_custom_call.1} parent=1 // pred_check
      %p33 = pneg %p32
    $region23: #{tpu_custom_call.1} parent=1 // pred_check_branch
      %35 = sbr.rel (%p33) target = $region25
    $region24: #{tpu_custom_call.1} parent=1 // pred_region
      %vm36 = vcmask 25600
      %37 = vst.msk [vmem:[#allocation2] sm:$0x3] %vm36, 0.0
    $region25: #{tpu_custom_call.1} parent=1 // pred_fallthru
      _
    %v38 = vld [vmem:[%s0] sm:$0xff]
    %v39 = vld [vmem:[%s0 + $0x8] sm:$0xff]
    %v40 = vld [vmem:[#allocation2] sm:$0x3]
    %vm41 = vcmask 31744
    %v42 = vsel %vm41, %v38, 0.0
    %v43 = vrot.slane %v42, 4
    %v44 = vadd.f32 %v42, %v43
    %v45 = vrot.slane %v44, 2
    %v46 = vadd.f32 %v44, %v45
    %v47 = vrot.slane %v46, 1
    %v48 = vadd.f32 %v46, %v47
    %v49 = vsel %vm41, %v39, 0.0
    %v50 = vrot.slane %v49, 4
    %v51 = vadd.f32 %v49, %v50
    %v52 = vrot.slane %v51, 2
    %v53 = vadd.f32 %v51, %v52
    %v54 = vrot.slane %v53, 1
    %v55 = vadd.f32 %v53, %v54
    %vm58 = vcmask 1041409
    %v59 = vsel %vm58, %v55, %v48
    %v61 = vadd.f32 %v40, %v59
    %vm62 = vcmask 25600
    %63 = vst.msk [vmem:[#allocation2] sm:$0x3] %vm62, %v61
    // Predicated region
    $region26: #{tpu_custom_call.1} parent=1 // pred_check
      %p64 = pneg %p32
    $region27: #{tpu_custom_call.1} parent=1 // pred_check_branch
      %66 = sbr.rel (%p64) target = $region29
    $region28: #{tpu_custom_call.1} parent=1 // pred_region
      %v67 = vld [vmem:[#allocation2] sm:$0x3]
      %v68 = vld [vmem:[%s1] sm:$0xff]
      %70 = vset.pattern.permute.xlu0 0
      %71 = vperm.xlu0 %70, %v67
      %v72 = vpop.permute.xlu0 %71
      %v75 = vlaneseq
      %v76 = vshrl.u32 %v75, 7
      %v77 = vsub.s32 0, %v76
      %v78 = vrot.slane %v68, %v77
      %v79 = vlaneseq
      %v80 = vshrl.u32 %v79, 7
      %v81 = vsub.s32 4, %v80
      %v82 = vrot.slane %v68, %v81
      %v85 = vlaneseq
      %v86 = vshrl.u32 %v85, 7
      %v87 = vsub.s32 0, %v86
      %v88 = vrot.slane %v78, %v87
      %v89 = vlaneseq
      %v90 = vshrl.u32 %v89, 7
      %v91 = vsub.s32 0, %v90
      %v92 = vrot.slane %v82, %v91
      %v93 = vmul.f32 %v72, %v88
      %v94 = vmul.f32 %v72, %v92
      %v95 = vadd.f32 %v93, 0.0
      %v96 = vadd.f32 %v94, 0.0
      %97 = vset.pattern.permute.xlu0 1
      %98 = vperm.xlu0 %97, %v67
      %v99 = vpop.permute.xlu0 %98
      %v101 = vlaneseq
      %v102 = vshrl.u32 %v101, 7
      %v103 = vsub.s32 1, %v102
      %v104 = vrot.slane %v68, %v103
      %v105 = vlaneseq
      %v106 = vshrl.u32 %v105, 7
      %v107 = vsub.s32 5, %v106
      %v108 = vrot.slane %v68, %v107
      %v111 = vlaneseq
      %v112 = vshrl.u32 %v111, 7
      %v113 = vsub.s32 1, %v112
      %v114 = vrot.slane %v104, %v113
      %v115 = vlaneseq
      %v116 = vshrl.u32 %v115, 7
      %v117 = vsub.s32 1, %v116
      %v118 = vrot.slane %v108, %v117
      %v119 = vmul.f32 %v99, %v114
      %v120 = vmul.f32 %v99, %v118
      %v121 = vadd.f32 %v95, %v119
      %v122 = vadd.f32 %v96, %v120
      %123 = vset.pattern.permute.xlu0 2
      %124 = vperm.xlu0 %123, %v67
      %v125 = vpop.permute.xlu0 %124
      %v127 = vlaneseq
      %v128 = vshrl.u32 %v127, 7
      %v129 = vsub.s32 2, %v128
      %v130 = vrot.slane %v68, %v129
      %v131 = vlaneseq
      %v132 = vshrl.u32 %v131, 7
      %v133 = vsub.s32 6, %v132
      %v134 = vrot.slane %v68, %v133
      %v137 = vlaneseq
      %v138 = vshrl.u32 %v137, 7
      %v139 = vsub.s32 2, %v138
      %v140 = vrot.slane %v130, %v139
      %v141 = vlaneseq
      %v142 = vshrl.u32 %v141, 7
      %v143 = vsub.s32 2, %v142
      %v144 = vrot.slane %v134, %v143
      %v145 = vmul.f32 %v125, %v140
      %v146 = vmul.f32 %v125, %v144
      %v147 = vadd.f32 %v121, %v145
      %v148 = vadd.f32 %v122, %v146
      %149 = vset.pattern.permute.xlu0 3
      %150 = vperm.xlu0 %149, %v67
      %v151 = vpop.permute.xlu0 %150
      %v153 = vlaneseq
      %v154 = vshrl.u32 %v153, 7
      %v155 = vsub.s32 3, %v154
      %v156 = vrot.slane %v68, %v155
      %v157 = vlaneseq
      %v158 = vshrl.u32 %v157, 7
      %v159 = vsub.s32 7, %v158
      %v160 = vrot.slane %v68, %v159
      %v163 = vlaneseq
      %v164 = vshrl.u32 %v163, 7
      %v165 = vsub.s32 3, %v164
      %v166 = vrot.slane %v156, %v165
      %v167 = vlaneseq
      %v168 = vshrl.u32 %v167, 7
      %v169 = vsub.s32 3, %v168
      %v170 = vrot.slane %v160, %v169
      %v171 = vmul.f32 %v151, %v166
      %v172 = vmul.f32 %v151, %v170
      %v173 = vadd.f32 %v147, %v171
      %v174 = vadd.f32 %v148, %v172
      %v175 = vld [vmem:[%s2] sm:$0x1]
      %v176 = vld [vmem:[%s2 + $0x1] sm:$0x1]
      %v177 = vlaneseq
      %v178 = vshrl.u32 %v177, 7
      %v179 = vsub.s32 0, %v178
      %v180 = vrot.slane %v175, %v179
      %v181 = vmul.f32 %v173, %v180
      %v182 = vlaneseq
      %v183 = vshrl.u32 %v182, 7
      %v184 = vsub.s32 0, %v183
      %v185 = vrot.slane %v176, %v184
      %v186 = vmul.f32 %v174, %v185
      %v187 = vsub.f32 %v181, %v186
      %v188 = vmul.f32 %v173, %v185
      %v189 = vmul.f32 %v174, %v180
      %v190 = vadd.f32 %v188, %v189
      %v191 = vmul.f32 %v187, 1.442695
      %v192 = vpow.pop %v191
      %v193 = vand.u32 2147483647, %v190
      %vm194 = vcmp.le.f32.partialorder %v193, 0.7853982
      %vm195 = vcmp.lt.s32.totalorder %v190, 0
      %v196 = vand.u32 %v190, 2139095040
      %v197 = vshrl.u32 %v196, 23
      %v198 = vsub.s32 %v197, 127
      %v199 = vand.u32 2147483647, %v190
      %v200 = vand.u32 %v199, 8388607
      %v201 = vor.u32 %v200, 8388608
      %v202 = vsub.s32 0, %v201
      %v203 = vadd.s32 %v198, 1
      %vm204 = vcmp.gt.s32.totalorder %v203, 0
      %v205 = vsel %vm204, %v203, 0
      %v206 = vshrl.u32 %v205, 5
      %v207 = vand.u32 %v205, 31
      %v208 = vsub.s32 32, %v207
      %v209 = vshrl.u32 683565275, %v208
      %v210 = vshll.u32 683565275, %v207
      %v211 = vshrl.u32 2475754826, %v208
      %v212 = vor.u32 %v210, %v211
      %v213 = vshll.u32 2475754826, %v207
      %v214 = vshrl.u32 2131351028, %v208
      %v215 = vor.u32 %v213, %v214
      %v216 = vshll.u32 2131351028, %v207
      %v217 = vshrl.u32 2102212464, %v208
      %v218 = vor.u32 %v216, %v217
      %v219 = vshll.u32 2102212464, %v207
      %v220 = vshrl.u32 920167782, %v208
      %v221 = vor.u32 %v219, %v220
      %v222 = vshll.u32 920167782, %v207
      %v223 = vshrl.u32 1326507024, %v208
      %v224 = vor.u32 %v222, %v223
      %vm225 = vcmp.lt.s32.totalorder %v206, 1
      %vm226 = vcmp.lt.s32.totalorder %v206, 2
      %vm227 = vcmp.lt.s32.totalorder %v206, 3
      %vm228 = vcmp.lt.s32.totalorder %v206, 4
      %v229 = vsel %vm225, %v209, %v212
      %v230 = vsel %vm228, %v218, 2102212464
      %v231 = vsel %vm227, %v215, %v230
      %v232 = vsel %vm226, %v229, %v231
      %v233 = vsel %vm225, %v212, %v215
      %v234 = vsel %vm228, %v221, 920167782
      %v235 = vsel %vm227, %v218, %v234
      %v236 = vsel %vm226, %v233, %v235
      %v237 = vsel %vm225, %v215, %v218
      %v238 = vsel %vm228, %v224, 1326507024
      %v239 = vsel %vm227, %v221, %v238
      %v240 = vsel %vm226, %v237, %v239
      %v241 = vshll.u32 %v201, 8
      %v242 = vmul.u32.u64.compose %v241, %v240
      %v243 = vextract.low.u32 %v242
      %v244 = vextract.high.u32 %v242
      %v245 = vmul.u32.u64.compose %v241, %v236
      %v246 = vextract.low.u32 %v245
      %v247 = vextract.high.u32 %v245
      %v248 = vmul.u32 %v241, %v232
      %v249 = vadd.s32 %v244, %v246
      %vm250 = vc.u32 %v244, %v246
      %v251 = vadd.s32 %v247, 1
      %v252 = vsel %vm250, %v251, %v247
      %v253 = vadd.s32 %v248, %v252
      %v254 = vadd.s32 %v253, 536870912
      %v255 = vshrl.u32 %v254, 30
      %v256 = vshll.u32 %v255, 30
      %v257 = vsub.s32 %v253, %v256
      %vm258 = vcmp.lt.s32.totalorder %v257, 0
      %v259 = vsub.s32 0, %v257
      %v260 = vsel %vm258, %v259, %v257
      %v261 = vclz %v260
      %v262 = vsub.s32 %v261, 2
      %vm263 = vcmp.gt.s32.totalorder 0, %v262
      %v264 = vsel %vm263, 0, %v262
      %v265 = vsub.s32 32, %v264
      %v266 = vshll.u32 %v257, %v264
      %v267 = vshrl.u32 %v249, %v265
      %v268 = vor.u32 %v266, %v267
      %v269 = vsub.s32 4294967266, %v264
      %v270 = vadd.s32 %v269, 127
      %v271 = vshll.u32 %v270, 23
      %v272 = vor.u32 4788187, %v271
      %v273 = vand.u32 2147483647, %v272
      %v275 = vcvt.s32.f32 %v268
      %v276 = vmul.f32 %v275, %v273
      %v277 = vxor.u32 %v276, 2147483648
      %v278 = vsel %vm195, %v277, %v276
      %v279 = vsub.s32 4, %v255
      %v280 = vsel %vm195, %v279, %v255
      %v281 = vsel %vm194, %v190, %v278
      %v282 = vsel %vm194, 0, %v280
      %v283 = vcosq.f32.pop %v281
      %v284 = vsinq.f32.pop %v281
      %vm285 = vweird.f32 %v190
      %v286 = vand.u32 %v282, 3
      %vm287 = vcmp.lt.s32.totalorder %v286, 2
      %vm288 = vcmp.eq.s32.totalorder %v286, 0
      %v289 = vxor.u32 %v284, 2147483648
      %v290 = vsel %vm288, %v283, %v289
      %vm291 = vcmp.eq.s32.totalorder %v286, 2
      %v292 = vxor.u32 %v283, 2147483648
      %v293 = vsel %vm291, %v292, %v284
      %v294 = vsel %vm287, %v290, %v293
      %v295 = vsel %vm285, nan, %v294
      %v296 = vmul.f32 %v192, %v295
      %v297 = vand.u32 2147483647, %v190
      %vm298 = vcmp.le.f32.partialorder %v297, 0.7853982
      %vm299 = vcmp.lt.s32.totalorder %v190, 0
      %v300 = vand.u32 %v190, 2139095040
      %v301 = vshrl.u32 %v300, 23
      %v302 = vsub.s32 %v301, 127
      %v303 = vand.u32 2147483647, %v190
      %v304 = vand.u32 %v303, 8388607
      %v305 = vor.u32 %v304, 8388608
      %v306 = vsub.s32 0, %v305
      %v307 = vadd.s32 %v302, 1
      %vm308 = vcmp.gt.s32.totalorder %v307, 0
      %v309 = vsel %vm308, %v307, 0
      %v310 = vshrl.u32 %v309, 5
      %v311 = vand.u32 %v309, 31
      %v312 = vsub.s32 32, %v311
      %v313 = vshrl.u32 683565275, %v312
      %v314 = vshll.u32 683565275, %v311
      %v315 = vshrl.u32 2475754826, %v312
      %v316 = vor.u32 %v314, %v315
      %v317 = vshll.u32 2475754826, %v311
      %v318 = vshrl.u32 2131351028, %v312
      %v319 = vor.u32 %v317, %v318
      %v320 = vshll.u32 2131351028, %v311
      %v321 = vshrl.u32 2102212464, %v312
      %v322 = vor.u32 %v320, %v321
      %v323 = vshll.u32 2102212464, %v311
      %v324 = vshrl.u32 920167782, %v312
      %v325 = vor.u32 %v323, %v324
      %v326 = vshll.u32 920167782, %v311
      %v327 = vshrl.u32 1326507024, %v312
      %v328 = vor.u32 %v326, %v327
      %vm329 = vcmp.lt.s32.totalorder %v310, 1
      %vm330 = vcmp.lt.s32.totalorder %v310, 2
      %vm331 = vcmp.lt.s32.totalorder %v310, 3
      %vm332 = vcmp.lt.s32.totalorder %v310, 4
      %v333 = vsel %vm329, %v313, %v316
      %v334 = vsel %vm332, %v322, 2102212464
      %v335 = vsel %vm331, %v319, %v334
      %v336 = vsel %vm330, %v333, %v335
      %v337 = vsel %vm329, %v316, %v319
      %v338 = vsel %vm332, %v325, 920167782
      %v339 = vsel %vm331, %v322, %v338
      %v340 = vsel %vm330, %v337, %v339
      %v341 = vsel %vm329, %v319, %v322
      %v342 = vsel %vm332, %v328, 1326507024
      %v343 = vsel %vm331, %v325, %v342
      %v344 = vsel %vm330, %v341, %v343
      %v345 = vshll.u32 %v305, 8
      %v346 = vmul.u32.u64.compose %v345, %v344
      %v347 = vextract.low.u32 %v346
      %v348 = vextract.high.u32 %v346
      %v349 = vmul.u32.u64.compose %v345, %v340
      %v350 = vextract.low.u32 %v349
      %v351 = vextract.high.u32 %v349
      %v352 = vmul.u32 %v345, %v336
      %v353 = vadd.s32 %v348, %v350
      %vm354 = vc.u32 %v348, %v350
      %v355 = vadd.s32 %v351, 1
      %v356 = vsel %vm354, %v355, %v351
      %v357 = vadd.s32 %v352, %v356
      %v358 = vadd.s32 %v357, 536870912
      %v359 = vshrl.u32 %v358, 30
      %v360 = vshll.u32 %v359, 30
      %v361 = vsub.s32 %v357, %v360
      %vm362 = vcmp.lt.s32.totalorder %v361, 0
      %v363 = vsub.s32 0, %v361
      %v364 = vsel %vm362, %v363, %v361
      %v365 = vclz %v364
      %v366 = vsub.s32 %v365, 2
      %vm367 = vcmp.gt.s32.totalorder 0, %v366
      %v368 = vsel %vm367, 0, %v366
      %v369 = vsub.s32 32, %v368
      %v370 = vshll.u32 %v361, %v368
      %v371 = vshrl.u32 %v353, %v369
      %v372 = vor.u32 %v370, %v371
      %v373 = vsub.s32 4294967266, %v368
      %v374 = vadd.s32 %v373, 127
      %v375 = vshll.u32 %v374, 23
      %v376 = vor.u32 4788187, %v375
      %v377 = vand.u32 2147483647, %v376
      %v379 = vcvt.s32.f32 %v372
      %v380 = vmul.f32 %v379, %v377
      %v381 = vxor.u32 %v380, 2147483648
      %v382 = vsel %vm299, %v381, %v380
      %v383 = vsub.s32 4, %v359
      %v384 = vsel %vm299, %v383, %v359
      %v385 = vsel %vm298, %v190, %v382
      %v386 = vsel %vm298, 0, %v384
      %v387 = vcosq.f32.pop %v385
      %v388 = vsinq.f32.pop %v385
      %vm389 = vweird.f32 %v190
      %v390 = vadd.s32 %v386, 3
      %v391 = vand.u32 %v390, 3
      %vm392 = vcmp.lt.s32.totalorder %v391, 2
      %vm393 = vcmp.eq.s32.totalorder %v391, 0
      %v394 = vxor.u32 %v388, 2147483648
      %v395 = vsel %vm393, %v387, %v394
      %vm396 = vcmp.eq.s32.totalorder %v391, 2
      %v397 = vxor.u32 %v387, 2147483648
      %v398 = vsel %vm396, %v397, %v388
      %v399 = vsel %vm392, %v395, %v398
      %v400 = vsel %vm389, nan, %v399
      %v401 = vmul.f32 %v192, %v400
      %v402 = vld [vmem:[#allocation3] sm:$0xff]
      %v403 = vld [vmem:[#allocation3 + $0x8] sm:$0xff]
      %v404 = vld [vmem:[#allocation3 + $0x10] sm:$0xff]
      %v405 = vld [vmem:[#allocation3 + $0x18] sm:$0xff]
      %v406 = vld [vmem:[#allocation3 + $0x20] sm:$0xff]
      %v407 = vld [vmem:[#allocation3 + $0x28] sm:$0xff]
      %v408 = vld [vmem:[#allocation3 + $0x30] sm:$0xff]
      %v409 = vld [vmem:[#allocation3 + $0x38] sm:$0xff]
      %v410 = vld [vmem:[#allocation3 + $0x40] sm:$0xff]
      %v411 = vld [vmem:[#allocation3 + $0x48] sm:$0xff]
      %v412 = vld [vmem:[#allocation3 + $0x50] sm:$0xff]
      %v413 = vld [vmem:[#allocation3 + $0x58] sm:$0xff]
      %v414 = vld [vmem:[#allocation3 + $0x60] sm:$0xff]
      %v415 = vld [vmem:[#allocation3 + $0x68] sm:$0xff]
      %v416 = vld [vmem:[#allocation3 + $0x70] sm:$0xff]
      %v417 = vld [vmem:[#allocation3 + $0x78] sm:$0xff]
      %v418 = vld [vmem:[#allocation3 + $0x80] sm:$0xff]
      %v419 = vld [vmem:[#allocation3 + $0x88] sm:$0xff]
      %v420 = vld [vmem:[#allocation3 + $0x90] sm:$0xff]
      %v421 = vld [vmem:[#allocation3 + $0x98] sm:$0xff]
      %v422 = vld [vmem:[#allocation3 + $0xa0] sm:$0xff]
      %v423 = vld [vmem:[#allocation3 + $0xa8] sm:$0xff]
      %v424 = vld [vmem:[#allocation3 + $0xb0] sm:$0xff]
      %v425 = vld [vmem:[#allocation3 + $0xb8] sm:$0xff]
      %v426 = vld [vmem:[#allocation3 + $0xc0] sm:$0xff]
      %v427 = vld [vmem:[#allocation3 + $0xc8] sm:$0xff]
      %v428 = vld [vmem:[#allocation3 + $0xd0] sm:$0xff]
      %v429 = vld [vmem:[#allocation3 + $0xd8] sm:$0xff]
      %v430 = vld [vmem:[#allocation3 + $0xe0] sm:$0xff]
      %v431 = vld [vmem:[#allocation3 + $0xe8] sm:$0xff]
      %v432 = vld [vmem:[#allocation3 + $0xf0] sm:$0xff]
      %v433 = vld [vmem:[#allocation3 + $0xf8] sm:$0xff]
      %s434 = scalar_lea.vmem [#allocation3], 256
      %v435 = vld [vmem:[%s434] sm:$0xff]
      %v436 = vld [vmem:[%s434 + $0x8] sm:$0xff]
      %v437 = vld [vmem:[%s434 + $0x10] sm:$0xff]
      %v438 = vld [vmem:[%s434 + $0x18] sm:$0xff]
      %v439 = vld [vmem:[%s434 + $0x20] sm:$0xff]
      %v440 = vld [vmem:[%s434 + $0x28] sm:$0xff]
      %v441 = vld [vmem:[%s434 + $0x30] sm:$0xff]
      %v442 = vld [vmem:[%s434 + $0x38] sm:$0xff]
      %v443 = vld [vmem:[%s434 + $0x40] sm:$0xff]
      %v444 = vld [vmem:[%s434 + $0x48] sm:$0xff]
      %v445 = vld [vmem:[%s434 + $0x50] sm:$0xff]
      %v446 = vld [vmem:[%s434 + $0x58] sm:$0xff]
      %v447 = vld [vmem:[%s434 + $0x60] sm:$0xff]
      %v448 = vld [vmem:[%s434 + $0x68] sm:$0xff]
      %v449 = vld [vmem:[%s434 + $0x70] sm:$0xff]
      %v450 = vld [vmem:[%s434 + $0x78] sm:$0xff]
      %v451 = vld [vmem:[%s434 + $0x80] sm:$0xff]
      %v452 = vld [vmem:[%s434 + $0x88] sm:$0xff]
      %v453 = vld [vmem:[%s434 + $0x90] sm:$0xff]
      %v454 = vld [vmem:[%s434 + $0x98] sm:$0xff]
      %v455 = vld [vmem:[%s434 + $0xa0] sm:$0xff]
      %v456 = vld [vmem:[%s434 + $0xa8] sm:$0xff]
      %v457 = vld [vmem:[%s434 + $0xb0] sm:$0xff]
      %v458 = vld [vmem:[%s434 + $0xb8] sm:$0xff]
      %v459 = vld [vmem:[%s434 + $0xc0] sm:$0xff]
      %v460 = vld [vmem:[%s434 + $0xc8] sm:$0xff]
      %v461 = vld [vmem:[%s434 + $0xd0] sm:$0xff]
      %v462 = vld [vmem:[%s434 + $0xd8] sm:$0xff]
      %v463 = vld [vmem:[%s434 + $0xe0] sm:$0xff]
      %v464 = vld [vmem:[%s434 + $0xe8] sm:$0xff]
      %v465 = vld [vmem:[%s434 + $0xf0] sm:$0xff]
      %v466 = vld [vmem:[%s434 + $0xf8] sm:$0xff]
      %467 = vmatprep.subr.mxu0 %v436
      %468 = vmatpush1.msra.mxu0 %v435
      %469 = vmatprep.subr.mxu0 %v438
      %470 = vmatpush1.msra.mxu0 %v437
      %471 = vmatprep.subr.mxu0 %v440
      %472 = vmatpush1.msra.mxu0 %v439
      %473 = vmatprep.subr.mxu0 %v442
      %474 = vmatpush1.msra.mxu0 %v441
      %475 = vmatprep.subr.mxu0 %v444
      %476 = vmatpush1.msra.mxu0 %v443
      %477 = vmatprep.subr.mxu0 %v446
      %478 = vmatpush1.msra.mxu0 %v445
      %479 = vmatprep.subr.mxu0 %v448
      %480 = vmatpush1.msra.mxu0 %v447
      %481 = vmatprep.subr.mxu0 %v450
      %482 = vmatpush1.msra.mxu0 %v449
      %483 = vmatprep.subr.mxu0 %v452
      %484 = vmatpush1.msra.mxu0 %v451
      %485 = vmatprep.subr.mxu0 %v454
      %486 = vmatpush1.msra.mxu0 %v453
      %487 = vmatprep.subr.mxu0 %v456
      %488 = vmatpush1.msra.mxu0 %v455
      %489 = vmatprep.subr.mxu0 %v458
      %490 = vmatpush1.msra.mxu0 %v457
      %491 = vmatprep.subr.mxu0 %v460
      %492 = vmatpush1.msra.mxu0 %v459
      %493 = vmatprep.subr.mxu0 %v462
      %494 = vmatpush1.msra.mxu0 %v461
      %495 = vmatprep.subr.mxu0 %v464
      %496 = vmatpush1.msra.mxu0 %v463
      %497 = vmatprep.subr.mxu0 %v466
      %498 = vmatpush1.msra.mxu0 %v465
      %499 = vmatprep.subr.mxu0 0.0
      %500 = vmatpush1.msra.mxu0 0.0
      %501 = vmatprep.subr.mxu0 0.0
      %502 = vmatpush1.msra.mxu0 0.0
      %503 = vmatprep.subr.mxu0 0.0
      %504 = vmatpush1.msra.mxu0 0.0
      %505 = vmatprep.subr.mxu0 0.0
      %506 = vmatpush1.msra.mxu0 0.0
      %507 = vmatprep.subr.mxu0 0.0
      %508 = vmatpush1.msra.mxu0 0.0
      %509 = vmatprep.subr.mxu0 0.0
      %510 = vmatpush1.msra.mxu0 0.0
      %511 = vmatprep.subr.mxu0 0.0
      %512 = vmatpush1.msra.mxu0 0.0
      %513 = vmatprep.subr.mxu0 0.0
      %514 = vmatpush1.msra.mxu0 0.0
      %515 = vmatprep.subr.mxu0 0.0
      %516 = vmatpush1.msra.mxu0 0.0
      %517 = vmatprep.subr.mxu0 0.0
      %518 = vmatpush1.msra.mxu0 0.0
      %519 = vmatprep.subr.mxu0 0.0
      %520 = vmatpush1.msra.mxu0 0.0
      %521 = vmatprep.subr.mxu0 0.0
      %522 = vmatpush1.msra.mxu0 0.0
      %523 = vmatprep.subr.mxu0 0.0
      %524 = vmatpush1.msra.mxu0 0.0
      %525 = vmatprep.subr.mxu0 0.0
      %526 = vmatpush1.msra.mxu0 0.0
      %527 = vmatprep.subr.mxu0 0.0
      %528 = vmatpush1.msra.mxu0 0.0
      %529 = vmatprep.subr.mxu0 0.0
      %530 = vmatpush1.msra.mxu0 0.0
      %531 = vmatprep.mubr.f32.mxu0 0.0
      %532 = vmatmul.mubr.f32.gmra.mrb[0].mxu0 %v401
      %v533 = vpop.f32.mrb[0].mxu0
      %v534 = vadd.f32 0.0, %v533
      %v535 = vpop.f32.mrb[0].mxu0
      %v536 = vadd.f32 0.0, %v535
      %537 = vdwg.mxu0
      %538 = vmatprep.subr.mxu0 %v403
      %539 = vmatpush1.msra.mxu0 %v402
      %540 = vmatprep.subr.mxu0 %v405
      %541 = vmatpush1.msra.mxu0 %v404
      %542 = vmatprep.subr.mxu0 %v407
      %543 = vmatpush1.msra.mxu0 %v406
      %544 = vmatprep.subr.mxu0 %v409
      %545 = vmatpush1.msra.mxu0 %v408
      %546 = vmatprep.subr.mxu0 %v411
      %547 = vmatpush1.msra.mxu0 %v410
      %548 = vmatprep.subr.mxu0 %v413
      %549 = vmatpush1.msra.mxu0 %v412
      %550 = vmatprep.subr.mxu0 %v415
      %551 = vmatpush1.msra.mxu0 %v414
      %552 = vmatprep.subr.mxu0 %v417
      %553 = vmatpush1.msra.mxu0 %v416
      %554 = vmatprep.subr.mxu0 %v419
      %555 = vmatpush1.msra.mxu0 %v418
      %556 = vmatprep.subr.mxu0 %v421
      %557 = vmatpush1.msra.mxu0 %v420
      %558 = vmatprep.subr.mxu0 %v423
      %559 = vmatpush1.msra.mxu0 %v422
      %560 = vmatprep.subr.mxu0 %v425
      %561 = vmatpush1.msra.mxu0 %v424
      %562 = vmatprep.subr.mxu0 %v427
      %563 = vmatpush1.msra.mxu0 %v426
      %564 = vmatprep.subr.mxu0 %v429
      %565 = vmatpush1.msra.mxu0 %v428
      %566 = vmatprep.subr.mxu0 %v431
      %567 = vmatpush1.msra.mxu0 %v430
      %568 = vmatprep.subr.mxu0 %v433
      %569 = vmatpush1.msra.mxu0 %v432
      %570 = vmatprep.subr.mxu0 0.0
      %571 = vmatpush1.msra.mxu0 0.0
      %572 = vmatprep.subr.mxu0 0.0
      %573 = vmatpush1.msra.mxu0 0.0
      %574 = vmatprep.subr.mxu0 0.0
      %575 = vmatpush1.msra.mxu0 0.0
      %576 = vmatprep.subr.mxu0 0.0
      %577 = vmatpush1.msra.mxu0 0.0
      %578 = vmatprep.subr.mxu0 0.0
      %579 = vmatpush1.msra.mxu0 0.0
      %580 = vmatprep.subr.mxu0 0.0
      %581 = vmatpush1.msra.mxu0 0.0
      %582 = vmatprep.subr.mxu0 0.0
      %583 = vmatpush1.msra.mxu0 0.0
      %584 = vmatprep.subr.mxu0 0.0
      %585 = vmatpush1.msra.mxu0 0.0
      %586 = vmatprep.subr.mxu0 0.0
      %587 = vmatpush1.msra.mxu0 0.0
      %588 = vmatprep.subr.mxu0 0.0
      %589 = vmatpush1.msra.mxu0 0.0
      %590 = vmatprep.subr.mxu0 0.0
      %591 = vmatpush1.msra.mxu0 0.0
      %592 = vmatprep.subr.mxu0 0.0
      %593 = vmatpush1.msra.mxu0 0.0
      %594 = vmatprep.subr.mxu0 0.0
      %595 = vmatpush1.msra.mxu0 0.0
      %596 = vmatprep.subr.mxu0 0.0
      %597 = vmatpush1.msra.mxu0 0.0
      %598 = vmatprep.subr.mxu0 0.0
      %599 = vmatpush1.msra.mxu0 0.0
      %600 = vmatprep.subr.mxu0 0.0
      %601 = vmatpush1.msra.mxu0 0.0
      %602 = vmatprep.mubr.f32.mxu0 0.0
      %603 = vmatmul.mubr.f32.gmra.mrb[0].mxu0 %v296
      %v604 = vpop.f32.mrb[0].mxu0
      %v605 = vadd.f32 %v534, %v604
      %v606 = vpop.f32.mrb[0].mxu0
      %v607 = vadd.f32 %v536, %v606
      %608 = vdwg.mxu0
      %v611 = vcombine.low %v605, %v607
      %v613 = vunpack.c.l.s4 1983009808
      %v614 = vunpack.c.0.s8 %v613
      %v615 = vlaneseq
      %v616 = vshrl.u32 %v615, 7
      %v617 = vsub.s32 %v614, %v616
      %v618 = vrot.slane %v611, %v617
      %620 = vst [vmem:[#allocation6] sm:$0xf] %v618
    $region29: #{tpu_custom_call.1} parent=1 // pred_fallthru
      _
    // Predicated region
    $region30: #{tpu_custom_call.1} parent=1 // pred_check
      _
    $region31: #{tpu_custom_call.1} parent=1 // pred_check_branch
      %622 = sbr.rel (0) target = $region33
    $region32: #{tpu_custom_call.1} parent=1 // pred_region
      %s624 = ssub.s32 64, 64
      %625 = vsyncadd [#allocation5], %s624
      %s627 = sshll.u32 [#allocation6], 4
      %s628 = int_to_ptr.vmem [resolvable:$true] %s627
      %630 = dma.vmem_to_hbm [thread:$0]  %s628, 64, %s4, [#allocation5]
    $region33: #{tpu_custom_call.1} parent=1 // pred_fallthru
      _
    // Predicated region
    $region34: #{tpu_custom_call.1} parent=1 // pred_check
      _
    $region35: #{tpu_custom_call.1} parent=1 // pred_check_branch
      %632 = sbr.rel (0) target = $region37
    $region36: #{tpu_custom_call.1} parent=1 // pred_region
      %633 = dma.done [#allocation5], 64
    $region37: #{tpu_custom_call.1} parent=1 // pred_fallthru
      _
    %634 = vsyncpa [#allocation4], 1
    %635 = vsyncpa [#allocation5], 1

</llo_original>
